<compile_context>
chip_gen: v6e
topology: v6e:2x2x1
jax: 0.10.0
libtpu: 0.0.40
codegen_flags: <defaults>
</compile_context>

<pallas_src>
import functools

import numpy as np
import jax
import jax.numpy as jnp
from jax.experimental import pallas as pl
from jax.experimental.pallas import tpu as pltpu

INF = 100000000.0  # matches the PyTorch module

# --- module "hyper-parameters" (deterministic, in-script) -------------------
SIZES = [[-1.0, 64.0]]
FPN_STRIDES = [8]
POS_RADIUS = 1
CENTER_SAMPLE = False            # TODO(synk): center_sample=True sampling path not implemented
IOU_LOSS_TYPE = "giou"

# 16 sublane-rows * 128 lanes = 2048 locations per program.
_MAX_TILE_ROWS = 16


def _pick_tile_rows(rows):
    # tile_rows must be a multiple of 8 (sublane tiling).  VMEM is not a
    # constraint on any TPU generation for this kernel (see header note).
    if rows <= _MAX_TILE_ROWS:
        return min(_MAX_TILE_ROWS, ((rows + 7) // 8) * 8)
    return _MAX_TILE_ROWS


# ---------------------------------------------------------------------------
# Fused kernel: target assignment + centerness + GIoU loss + partial sums.
#   coords_ref : (2, tile_rows, 128)   plane 0 = xs, plane 1 = ys   (VMEM)
#   pred_ref   : (4, tile_rows, 128)   predicted (l, t, r, b)       (VMEM)
#   boxes_ref  : (B*G*4,) gt boxes xyxy, flattened                  (SMEM)
#   areas_ref  : (B*G,)   gt areas                                  (SMEM)
#   out_ref    : (8, 128) per-lane partials; rows 0..3 = [sum(l*w), sum(w),
#                sum(l), n_pos] (reduced over sublanes only), rows 4..7 zero.
# ---------------------------------------------------------------------------
def _fcos_loss_kernel(coords_ref, pred_ref, boxes_ref, areas_ref, out_ref,
                      *, n_gt, size_lo, size_hi, loss_type, tile_rows, n_loc,
                      mask_tail):
    ti = pl.program_id(0)        # location-tile index
    b = pl.program_id(1)         # batch index

    xs = coords_ref[0]           # (tile_rows, 128)
    ys = coords_ref[1]

    bbase = b * (n_gt * 4)
    abase = b * n_gt

    # Running min-area selection over gt boxes (strict '<' keeps the first
    # minimal index => same tie-break as torch .min(dim)).
    min_area = jnp.full(xs.shape, INF, dtype=jnp.float32)
    sel_l = jnp.zeros_like(xs)
    sel_t = jnp.zeros_like(xs)
    sel_r = jnp.zeros_like(xs)
    sel_b = jnp.zeros_like(xs)

    for g in range(n_gt):                          # small static unroll
        x0 = boxes_ref[bbase + 4 * g + 0]          # SMEM scalar reads
        y0 = boxes_ref[bbase + 4 * g + 1]
        x1 = boxes_ref[bbase + 4 * g + 2]
        y1 = boxes_ref[bbase + 4 * g + 3]
        ar = areas_ref[abase + g]

        l = xs - x0                                # scalar splat vs (rows,128)
        t = ys - y0
        r = x1 - xs
        bo = y1 - ys

        mn = jnp.minimum(jnp.minimum(l, t), jnp.minimum(r, bo))
        mx = jnp.maximum(jnp.maximum(l, t), jnp.maximum(r, bo))
        valid = (mn > 0.0) & (mx >= size_lo) & (mx <= size_hi)

        take = valid & (ar < min_area)             # preserves first-min tie-break
        min_area = jnp.where(take, ar, min_area)
        sel_l = jnp.where(take, l, sel_l)
        sel_t = jnp.where(take, t, sel_t)
        sel_r = jnp.where(take, r, sel_r)
        sel_b = jnp.where(take, bo, sel_b)

    pos = min_area < INF                           # label > 0 (single class)

    if mask_tail:
        row = jax.lax.broadcasted_iota(jnp.int32, xs.shape, 0)
        lane = jax.lax.broadcasted_iota(jnp.int32, xs.shape, 1)
        gidx = (ti * tile_rows + row) * 128 + lane
        pos = jnp.logical_and(pos, gidx < n_loc)   # padded locations contribute 0

    # ---- IoU / GIoU loss against predictions (cast in-kernel) --------------
    p = pred_ref[...].astype(jnp.float32)          # (4, tile_rows, 128)
    p_l = p[0]
    p_t = p[1]
    p_r = p[2]
    p_b = p[3]

    t_l, t_t, t_r, t_b = sel_l, sel_t, sel_r, sel_b

    target_area = (t_l + t_r) * (t_t + t_b)
    pred_area = (p_l + p_r) * (p_t + p_b)
    w_int = jnp.minimum(p_l, t_l) + jnp.minimum(p_r, t_r)
    h_int = jnp.minimum(p_b, t_b) + jnp.minimum(p_t, t_t)
    area_int = w_int * h_int
    area_union = target_area + pred_area - area_int
    ious = (area_int + 1.0) / (area_union + 1.0)   # exact divide (tolerance)

    if loss_type == "iou":
        loss = -jnp.log(ious)
    else:  # 'giou'
        g_w = jnp.maximum(p_l, t_l) + jnp.maximum(p_r, t_r)
        g_h = jnp.maximum(p_b, t_b) + jnp.maximum(p_t, t_t)
        g_int = g_w * g_h + 1e-7
        gious = ious - (g_int - area_union) / g_int
        loss = 1.0 - gious

    # Centerness weight: sqrt * rsqrt keeps the reciprocal work on the EUP
    # (off the saturating VALU slot); clamped denominator => no NaN on
    # background locations where the targets are all zero.
    lr_min = jnp.minimum(t_l, t_r)
    lr_max = jnp.maximum(t_l, t_r)
    tb_min = jnp.minimum(t_t, t_b)
    tb_max = jnp.maximum(t_t, t_b)
    ctr = jnp.sqrt(lr_min * tb_min) * jax.lax.rsqrt(
        jnp.maximum(lr_max * tb_max, 1e-12))

    w_m = jnp.where(pos, ctr, 0.0)
    l_m = jnp.where(pos, loss, 0.0)

    # Reduce over sublanes only; per-lane partials keep the expensive 128-lane
    # reduction out of the kernel epilogue.
    s_lw = jnp.sum(l_m * w_m, axis=0, keepdims=True)            # (1, 128)
    s_w = jnp.sum(w_m, axis=0, keepdims=True)
    s_l = jnp.sum(l_m, axis=0, keepdims=True)
    s_n = jnp.sum(pos.astype(jnp.float32), axis=0, keepdims=True)

    # Single unmasked lane-dense (8, 128) store.
    out_ref[...] = jnp.concatenate(
        [s_lw, s_w, s_l, s_n, jnp.zeros((4, 128), jnp.float32)], axis=0)


# ---------------------------------------------------------------------------
# Glue: mimics Detection_criterion.forward for a single FPN level.
# ---------------------------------------------------------------------------
class TargetBoxes:
    """Minimal BoxList stand-in (mode='xyxy')."""

    def __init__(self, box):
        self.box = box
        self.mode = "xyxy"

    def area(self):
        b = self.box
        return (b[:, 2] - b[:, 0]) * (b[:, 3] - b[:, 1])


def detection_criterion_forward(locations_list, box_pred, targets):
    loc = locations_list[0].astype(jnp.float32)            # (N, 2)
    N = loc.shape[0]
    B, C, H, W = box_pred.shape
    assert C == 4 and H * W == N

    boxes = jnp.stack([t.box for t in targets], 0).astype(jnp.float32)     # (B, G, 4)
    areas = jnp.stack([t.area() for t in targets], 0).astype(jnp.float32)  # (B, G)
    G = boxes.shape[1]
    boxes_flat = boxes.reshape(B * G * 4)                   # SMEM scalars
    areas_flat = areas.reshape(B * G)

    rows = -(-N // 128)
    tile_rows = _pick_tile_rows(rows)
    nt = -(-rows // tile_rows)
    padded_rows = nt * tile_rows
    padded_n = padded_rows * 128
    mask_tail = padded_n != N

    # Dense (rows, 128) layout of the location axis.
    coords = loc.T                                          # (2, N): xs, ys
    if mask_tail:
        coords = jnp.pad(coords, ((0, 0), (0, padded_n - N)))
    coords = coords.reshape(2, padded_rows, 128)

    # NCHW (B,4,H,W) -> (B,4,N) is a pure view; per-location data identical to
    # box_pred.permute(0,2,3,1).reshape(-1,4).  Keep incoming dtype (bf16 ok);
    # the f32 cast happens in-kernel.
    pred = box_pred.reshape(B, 4, N)
    if mask_tail:
        pred = jnp.pad(pred, ((0, 0), (0, 0), (0, padded_n - N)))
    pred = pred.reshape(B, 4, padded_rows, 128)

    size_lo, size_hi = SIZES[0]
    kernel = functools.partial(
        _fcos_loss_kernel, n_gt=G,
        size_lo=float(size_lo), size_hi=float(size_hi),
        loss_type=IOU_LOSS_TYPE, tile_rows=tile_rows, n_loc=N,
        mask_tail=mask_tail)

    partials = pl.pallas_call(
        kernel,
        out_shape=jax.ShapeDtypeStruct((nt, B, 8, 128), jnp.float32),
        grid=(nt, B),   # coords block index constant across the inner B axis
        in_specs=[
            pl.BlockSpec((2, tile_rows, 128), lambda t, b: (0, t, 0)),
            pl.BlockSpec((None, 4, tile_rows, 128), lambda t, b: (b, 0, t, 0)),
            pl.BlockSpec(memory_space=pltpu.MemorySpace.SMEM),
            pl.BlockSpec(memory_space=pltpu.MemorySpace.SMEM),
        ],
        out_specs=pl.BlockSpec((None, None, 8, 128), lambda t, b: (t, b, 0, 0)),
        compiler_params=pltpu.CompilerParams(
            dimension_semantics=("parallel", "parallel")),
    )(coords, pred, boxes_flat, areas_flat)

    # Tiny (nt, B, 4, 128) reduction of per-program per-lane partials in JAX.
    sums = jnp.sum(partials[:, :, 0:4, :], axis=(0, 1, 3))
    sum_lw, sum_w, sum_l, n_pos = sums[0], sums[1], sums[2], sums[3]

    safe_w = jnp.where(sum_w > 0, sum_w, 1.0)
    safe_n = jnp.where(n_pos > 0, n_pos, 1.0)
    weighted = sum_lw / safe_w
    unweighted = sum_l / safe_n
    # no positives -> box_flat[pos_id].sum() == 0
    return jnp.where(n_pos > 0, jnp.where(sum_w > 0, weighted, unweighted), 0.0)


# ---------------------------------------------------------------------------
# Pure-JAX reference (mirrors the PyTorch forward) for a sanity check.
# ---------------------------------------------------------------------------
def reference_forward(locations_list, box_pred, targets):
    loc = locations_list[0]
    xs, ys = loc[:, 0], loc[:, 1]
    N = xs.shape[0]
    B = box_pred.shape[0]
    size_lo, size_hi = SIZES[0]

    labels_all, boxt_all = [], []
    for i in range(B):
        bb = targets[i].box
        area = targets[i].area()
        l = xs[:, None] - bb[None, :, 0]
        t = ys[:, None] - bb[None, :, 1]
        r = bb[None, :, 2] - xs[:, None]
        b = bb[None, :, 3] - ys[:, None]
        bt = jnp.stack([l, t, r, b], 2)                   # (N, G, 4)
        is_in = bt.min(2) > 0
        maxbt = bt.max(2)
        cared = (maxbt >= size_lo) & (maxbt <= size_hi)
        gt_area = jnp.where(is_in & cared,
                            jnp.broadcast_to(area[None], is_in.shape), INF)
        min_area = gt_area.min(1)
        gt_id = jnp.argmin(gt_area, 1)
        boxt_all.append(bt[jnp.arange(N), gt_id])
        labels_all.append(jnp.where(min_area == INF, 0.0, 1.0))

    labels_flat = jnp.concatenate(labels_all, 0)
    boxt_flat = jnp.concatenate(boxt_all, 0)
    pred_flat = jnp.transpose(box_pred, (0, 2, 3, 1)).reshape(-1, 4)

    mask = labels_flat > 0
    t_l, t_t, t_r, t_b = (boxt_flat[:, k] for k in range(4))
    p_l, p_t, p_r, p_b = (pred_flat[:, k] for k in range(4))

    target_area = (t_l + t_r) * (t_t + t_b)
    pred_area = (p_l + p_r) * (p_t + p_b)
    w_int = jnp.minimum(p_l, t_l) + jnp.minimum(p_r, t_r)
    h_int = jnp.minimum(p_b, t_b) + jnp.minimum(p_t, t_t)
    area_int = w_int * h_int
    area_union = target_area + pred_area - area_int
    ious = (area_int + 1.0) / (area_union + 1.0)
    if IOU_LOSS_TYPE == "iou":
        loss = -jnp.log(ious)
    else:
        g_w = jnp.maximum(p_l, t_l) + jnp.maximum(p_r, t_r)
        g_h = jnp.maximum(p_b, t_b) + jnp.maximum(p_t, t_t)
        g_int = g_w * g_h + 1e-7
        loss = 1.0 - (ious - (g_int - area_union) / g_int)

    ctr = jnp.sqrt((jnp.minimum(t_l, t_r) / jnp.maximum(t_l, t_r)) *
                   (jnp.minimum(t_t, t_b) / jnp.maximum(t_t, t_b)))
    w_m = jnp.where(mask, ctr, 0.0)
    l_m = jnp.where(mask, loss, 0.0)
    n_pos = mask.astype(jnp.float32).sum()
    sum_w = w_m.sum()
    weighted = (l_m * w_m).sum() / jnp.where(sum_w > 0, sum_w, 1.0)
    unweighted = l_m.sum() / jnp.where(n_pos > 0, n_pos, 1.0)
    return jnp.where(n_pos > 0, jnp.where(sum_w > 0, weighted, unweighted), 0.0)


# ---------------------------------------------------------------------------
if __name__ == "__main__":
    B, H, W, G = 2, 16, 16, 6
    stride = FPN_STRIDES[0]
    N = H * W

    # FCOS-style locations for one level, h-major then w (matches NCHW flatten)
    shift_x = (jnp.arange(W, dtype=jnp.float32) * stride + stride // 2)
    shift_y = (jnp.arange(H, dtype=jnp.float32) * stride + stride // 2)
    ys_g, xs_g = jnp.meshgrid(shift_y, shift_x, indexing="ij")
    locations = [jnp.stack([xs_g.reshape(-1), ys_g.reshape(-1)], axis=1)]  # (N, 2)

    key = jax.random.PRNGKey(0)
    k1, k2, k3 = jax.random.split(key, 3)
    xy1 = jax.random.uniform(k1, (B, G, 2), minval=0.0, maxval=70.0)
    wh = jax.random.uniform(k2, (B, G, 2), minval=12.0, maxval=56.0)
    gt_boxes = jnp.concatenate([xy1, xy1 + wh], axis=-1)                   # (B, G, 4)
    targets = [TargetBoxes(gt_boxes[i]) for i in range(B)]

    box_pred = jax.random.uniform(k3, (B, 4, H, W), minval=0.5, maxval=30.0)

    out = detection_criterion_forward(locations, box_pred, targets)
    out = jax.block_until_ready(out)

    ref = jax.block_until_ready(reference_forward(locations, box_pred, targets))
    assert np.isfinite(float(out)), "kernel produced non-finite loss"
    assert np.allclose(np.asarray(out), np.asarray(ref), rtol=3e-4, atol=3e-5), (
        float(out), float(ref))

    print("KERNEL_OK")
</pallas_src>

<mosaic_0001>
module attributes {stable_mosaic.version = 11 : i64} {
  func.func @_fcos_loss_kernel(%arg0: i32, %arg1: i32, %arg2: memref<2x8x128xf32, #tpu.memory_space<vmem>>, %arg3: memref<1x4x8x128xf32, #tpu.memory_space<vmem>>, %arg4: memref<48xf32, #tpu.memory_space<smem>>, %arg5: memref<12xf32, #tpu.memory_space<smem>>, %arg6: memref<1x1x8x128xf32, #tpu.memory_space<vmem>>) attributes {dimension_semantics = [#tpu.dimension_semantics<parallel>, #tpu.dimension_semantics<parallel>], iteration_bounds = array<i64: 1, 2>, scalar_prefetch = 0 : i64, scratch_operands = 0 : i64, tpu.core_type = #tpu.core_type<tc>, window_params = [{transform_indices = @transform_0, window_bounds = array<i64: 2, 8, 128>}, {transform_indices = @transform_1, window_bounds = array<i64: 1, 4, 8, 128>}, {transform_indices = @transform_2, window_bounds = array<i64: 48>}, {transform_indices = @transform_3, window_bounds = array<i64: 12>}, {transform_indices = @transform_4, window_bounds = array<i64: 1, 1, 8, 128>}]} {
    %c0 = arith.constant 0 : index
    %c0_0 = arith.constant 0 : index
    %c0_1 = arith.constant 0 : index
    %0 = vector.load %arg2[%c0, %c0_0, %c0_1] : memref<2x8x128xf32, #tpu.memory_space<vmem>>, vector<1x8x128xf32>
    %1 = vector.shape_cast %0 : vector<1x8x128xf32> to vector<8x128xf32>
    %c1 = arith.constant 1 : index
    %c0_2 = arith.constant 0 : index
    %c0_3 = arith.constant 0 : index
    %2 = vector.load %arg2[%c1, %c0_2, %c0_3] : memref<2x8x128xf32, #tpu.memory_space<vmem>>, vector<1x8x128xf32>
    %3 = vector.shape_cast %2 : vector<1x8x128xf32> to vector<8x128xf32>
    %c24_i32 = arith.constant 24 : i32
    %4 = arith.muli %arg1, %c24_i32 : i32
    %c6_i32 = arith.constant 6 : i32
    %5 = arith.muli %arg1, %c6_i32 : i32
    %cst = arith.constant 1.000000e+08 : f32
    %6 = vector.broadcast %cst : f32 to vector<8x128xf32>
    %cst_4 = arith.constant 0.000000e+00 : f32
    %7 = vector.broadcast %cst_4 : f32 to vector<8x128xf32>
    %cst_5 = arith.constant 0.000000e+00 : f32
    %8 = vector.broadcast %cst_5 : f32 to vector<8x128xf32>
    %cst_6 = arith.constant 0.000000e+00 : f32
    %9 = vector.broadcast %cst_6 : f32 to vector<8x128xf32>
    %cst_7 = arith.constant 0.000000e+00 : f32
    %10 = vector.broadcast %cst_7 : f32 to vector<8x128xf32>
    %c0_i32 = arith.constant 0 : i32
    %11 = arith.addi %4, %c0_i32 : i32
    %c0_i32_8 = arith.constant 0 : i32
    %12 = arith.addi %11, %c0_i32_8 : i32
    %13 = arith.index_cast %12 : i32 to index
    %14 = memref.load %arg4[%13] : memref<48xf32, #tpu.memory_space<smem>>
    %c0_i32_9 = arith.constant 0 : i32
    %15 = arith.addi %4, %c0_i32_9 : i32
    %c1_i32 = arith.constant 1 : i32
    %16 = arith.addi %15, %c1_i32 : i32
    %17 = arith.index_cast %16 : i32 to index
    %18 = memref.load %arg4[%17] : memref<48xf32, #tpu.memory_space<smem>>
    %c0_i32_10 = arith.constant 0 : i32
    %19 = arith.addi %4, %c0_i32_10 : i32
    %c2_i32 = arith.constant 2 : i32
    %20 = arith.addi %19, %c2_i32 : i32
    %21 = arith.index_cast %20 : i32 to index
    %22 = memref.load %arg4[%21] : memref<48xf32, #tpu.memory_space<smem>>
    %c0_i32_11 = arith.constant 0 : i32
    %23 = arith.addi %4, %c0_i32_11 : i32
    %c3_i32 = arith.constant 3 : i32
    %24 = arith.addi %23, %c3_i32 : i32
    %25 = arith.index_cast %24 : i32 to index
    %26 = memref.load %arg4[%25] : memref<48xf32, #tpu.memory_space<smem>>
    %c0_i32_12 = arith.constant 0 : i32
    %27 = arith.addi %5, %c0_i32_12 : i32
    %28 = arith.index_cast %27 : i32 to index
    %29 = memref.load %arg5[%28] : memref<12xf32, #tpu.memory_space<smem>>
    %30 = vector.broadcast %14 : f32 to vector<8x128xf32>
    %31 = arith.subf %1, %30 : vector<8x128xf32>
    %32 = vector.broadcast %18 : f32 to vector<8x128xf32>
    %33 = arith.subf %3, %32 : vector<8x128xf32>
    %34 = vector.broadcast %22 : f32 to vector<8x128xf32>
    %35 = arith.subf %34, %1 : vector<8x128xf32>
    %36 = vector.broadcast %26 : f32 to vector<8x128xf32>
    %37 = arith.subf %36, %3 : vector<8x128xf32>
    %38 = arith.minimumf %31, %33 : vector<8x128xf32>
    %39 = arith.minimumf %35, %37 : vector<8x128xf32>
    %40 = arith.minimumf %38, %39 : vector<8x128xf32>
    %41 = arith.maximumf %31, %33 : vector<8x128xf32>
    %42 = arith.maximumf %35, %37 : vector<8x128xf32>
    %43 = arith.maximumf %41, %42 : vector<8x128xf32>
    %cst_13 = arith.constant 0.000000e+00 : f32
    %44 = vector.broadcast %cst_13 : f32 to vector<8x128xf32>
    %45 = arith.cmpf ogt, %40, %44 : vector<8x128xf32>
    %cst_14 = arith.constant -1.000000e+00 : f32
    %46 = vector.broadcast %cst_14 : f32 to vector<8x128xf32>
    %47 = arith.cmpf oge, %43, %46 : vector<8x128xf32>
    %48 = arith.andi %45, %47 : vector<8x128xi1>
    %cst_15 = arith.constant 6.400000e+01 : f32
    %49 = vector.broadcast %cst_15 : f32 to vector<8x128xf32>
    %50 = arith.cmpf ole, %43, %49 : vector<8x128xf32>
    %51 = arith.andi %48, %50 : vector<8x128xi1>
    %52 = vector.broadcast %29 : f32 to vector<8x128xf32>
    %53 = arith.cmpf olt, %52, %6 : vector<8x128xf32>
    %54 = arith.andi %51, %53 : vector<8x128xi1>
    %55 = vector.broadcast %29 : f32 to vector<8x128xf32>
    %56 = arith.select %54, %55, %6 : vector<8x128xi1>, vector<8x128xf32>
    %57 = arith.select %54, %31, %7 : vector<8x128xi1>, vector<8x128xf32>
    %58 = arith.select %54, %33, %8 : vector<8x128xi1>, vector<8x128xf32>
    %59 = arith.select %54, %35, %9 : vector<8x128xi1>, vector<8x128xf32>
    %60 = arith.select %54, %37, %10 : vector<8x128xi1>, vector<8x128xf32>
    %c4_i32 = arith.constant 4 : i32
    %61 = arith.addi %4, %c4_i32 : i32
    %c0_i32_16 = arith.constant 0 : i32
    %62 = arith.addi %61, %c0_i32_16 : i32
    %63 = arith.index_cast %62 : i32 to index
    %64 = memref.load %arg4[%63] : memref<48xf32, #tpu.memory_space<smem>>
    %c4_i32_17 = arith.constant 4 : i32
    %65 = arith.addi %4, %c4_i32_17 : i32
    %c1_i32_18 = arith.constant 1 : i32
    %66 = arith.addi %65, %c1_i32_18 : i32
    %67 = arith.index_cast %66 : i32 to index
    %68 = memref.load %arg4[%67] : memref<48xf32, #tpu.memory_space<smem>>
    %c4_i32_19 = arith.constant 4 : i32
    %69 = arith.addi %4, %c4_i32_19 : i32
    %c2_i32_20 = arith.constant 2 : i32
    %70 = arith.addi %69, %c2_i32_20 : i32
    %71 = arith.index_cast %70 : i32 to index
    %72 = memref.load %arg4[%71] : memref<48xf32, #tpu.memory_space<smem>>
    %c4_i32_21 = arith.constant 4 : i32
    %73 = arith.addi %4, %c4_i32_21 : i32
    %c3_i32_22 = arith.constant 3 : i32
    %74 = arith.addi %73, %c3_i32_22 : i32
    %75 = arith.index_cast %74 : i32 to index
    %76 = memref.load %arg4[%75] : memref<48xf32, #tpu.memory_space<smem>>
    %c1_i32_23 = arith.constant 1 : i32
    %77 = arith.addi %5, %c1_i32_23 : i32
    %78 = arith.index_cast %77 : i32 to index
    %79 = memref.load %arg5[%78] : memref<12xf32, #tpu.memory_space<smem>>
    %80 = vector.broadcast %64 : f32 to vector<8x128xf32>
    %81 = arith.subf %1, %80 : vector<8x128xf32>
    %82 = vector.broadcast %68 : f32 to vector<8x128xf32>
    %83 = arith.subf %3, %82 : vector<8x128xf32>
    %84 = vector.broadcast %72 : f32 to vector<8x128xf32>
    %85 = arith.subf %84, %1 : vector<8x128xf32>
    %86 = vector.broadcast %76 : f32 to vector<8x128xf32>
    %87 = arith.subf %86, %3 : vector<8x128xf32>
    %88 = arith.minimumf %81, %83 : vector<8x128xf32>
    %89 = arith.minimumf %85, %87 : vector<8x128xf32>
    %90 = arith.minimumf %88, %89 : vector<8x128xf32>
    %91 = arith.maximumf %81, %83 : vector<8x128xf32>
    %92 = arith.maximumf %85, %87 : vector<8x128xf32>
    %93 = arith.maximumf %91, %92 : vector<8x128xf32>
    %cst_24 = arith.constant 0.000000e+00 : f32
    %94 = vector.broadcast %cst_24 : f32 to vector<8x128xf32>
    %95 = arith.cmpf ogt, %90, %94 : vector<8x128xf32>
    %cst_25 = arith.constant -1.000000e+00 : f32
    %96 = vector.broadcast %cst_25 : f32 to vector<8x128xf32>
    %97 = arith.cmpf oge, %93, %96 : vector<8x128xf32>
    %98 = arith.andi %95, %97 : vector<8x128xi1>
    %cst_26 = arith.constant 6.400000e+01 : f32
    %99 = vector.broadcast %cst_26 : f32 to vector<8x128xf32>
    %100 = arith.cmpf ole, %93, %99 : vector<8x128xf32>
    %101 = arith.andi %98, %100 : vector<8x128xi1>
    %102 = vector.broadcast %79 : f32 to vector<8x128xf32>
    %103 = arith.cmpf olt, %102, %56 : vector<8x128xf32>
    %104 = arith.andi %101, %103 : vector<8x128xi1>
    %105 = vector.broadcast %79 : f32 to vector<8x128xf32>
    %106 = arith.select %104, %105, %56 : vector<8x128xi1>, vector<8x128xf32>
    %107 = arith.select %104, %81, %57 : vector<8x128xi1>, vector<8x128xf32>
    %108 = arith.select %104, %83, %58 : vector<8x128xi1>, vector<8x128xf32>
    %109 = arith.select %104, %85, %59 : vector<8x128xi1>, vector<8x128xf32>
    %110 = arith.select %104, %87, %60 : vector<8x128xi1>, vector<8x128xf32>
    %c8_i32 = arith.constant 8 : i32
    %111 = arith.addi %4, %c8_i32 : i32
    %c0_i32_27 = arith.constant 0 : i32
    %112 = arith.addi %111, %c0_i32_27 : i32
    %113 = arith.index_cast %112 : i32 to index
    %114 = memref.load %arg4[%113] : memref<48xf32, #tpu.memory_space<smem>>
    %c8_i32_28 = arith.constant 8 : i32
    %115 = arith.addi %4, %c8_i32_28 : i32
    %c1_i32_29 = arith.constant 1 : i32
    %116 = arith.addi %115, %c1_i32_29 : i32
    %117 = arith.index_cast %116 : i32 to index
    %118 = memref.load %arg4[%117] : memref<48xf32, #tpu.memory_space<smem>>
    %c8_i32_30 = arith.constant 8 : i32
    %119 = arith.addi %4, %c8_i32_30 : i32
    %c2_i32_31 = arith.constant 2 : i32
    %120 = arith.addi %119, %c2_i32_31 : i32
    %121 = arith.index_cast %120 : i32 to index
    %122 = memref.load %arg4[%121] : memref<48xf32, #tpu.memory_space<smem>>
    %c8_i32_32 = arith.constant 8 : i32
    %123 = arith.addi %4, %c8_i32_32 : i32
    %c3_i32_33 = arith.constant 3 : i32
    %124 = arith.addi %123, %c3_i32_33 : i32
    %125 = arith.index_cast %124 : i32 to index
    %126 = memref.load %arg4[%125] : memref<48xf32, #tpu.memory_space<smem>>
    %c2_i32_34 = arith.constant 2 : i32
    %127 = arith.addi %5, %c2_i32_34 : i32
    %128 = arith.index_cast %127 : i32 to index
    %129 = memref.load %arg5[%128] : memref<12xf32, #tpu.memory_space<smem>>
    %130 = vector.broadcast %114 : f32 to vector<8x128xf32>
    %131 = arith.subf %1, %130 : vector<8x128xf32>
    %132 = vector.broadcast %118 : f32 to vector<8x128xf32>
    %133 = arith.subf %3, %132 : vector<8x128xf32>
    %134 = vector.broadcast %122 : f32 to vector<8x128xf32>
    %135 = arith.subf %134, %1 : vector<8x128xf32>
    %136 = vector.broadcast %126 : f32 to vector<8x128xf32>
    %137 = arith.subf %136, %3 : vector<8x128xf32>
    %138 = arith.minimumf %131, %133 : vector<8x128xf32>
    %139 = arith.minimumf %135, %137 : vector<8x128xf32>
    %140 = arith.minimumf %138, %139 : vector<8x128xf32>
    %141 = arith.maximumf %131, %133 : vector<8x128xf32>
    %142 = arith.maximumf %135, %137 : vector<8x128xf32>
    %143 = arith.maximumf %141, %142 : vector<8x128xf32>
    %cst_35 = arith.constant 0.000000e+00 : f32
    %144 = vector.broadcast %cst_35 : f32 to vector<8x128xf32>
    %145 = arith.cmpf ogt, %140, %144 : vector<8x128xf32>
    %cst_36 = arith.constant -1.000000e+00 : f32
    %146 = vector.broadcast %cst_36 : f32 to vector<8x128xf32>
    %147 = arith.cmpf oge, %143, %146 : vector<8x128xf32>
    %148 = arith.andi %145, %147 : vector<8x128xi1>
    %cst_37 = arith.constant 6.400000e+01 : f32
    %149 = vector.broadcast %cst_37 : f32 to vector<8x128xf32>
    %150 = arith.cmpf ole, %143, %149 : vector<8x128xf32>
    %151 = arith.andi %148, %150 : vector<8x128xi1>
    %152 = vector.broadcast %129 : f32 to vector<8x128xf32>
    %153 = arith.cmpf olt, %152, %106 : vector<8x128xf32>
    %154 = arith.andi %151, %153 : vector<8x128xi1>
    %155 = vector.broadcast %129 : f32 to vector<8x128xf32>
    %156 = arith.select %154, %155, %106 : vector<8x128xi1>, vector<8x128xf32>
    %157 = arith.select %154, %131, %107 : vector<8x128xi1>, vector<8x128xf32>
    %158 = arith.select %154, %133, %108 : vector<8x128xi1>, vector<8x128xf32>
    %159 = arith.select %154, %135, %109 : vector<8x128xi1>, vector<8x128xf32>
    %160 = arith.select %154, %137, %110 : vector<8x128xi1>, vector<8x128xf32>
    %c12_i32 = arith.constant 12 : i32
    %161 = arith.addi %4, %c12_i32 : i32
    %c0_i32_38 = arith.constant 0 : i32
    %162 = arith.addi %161, %c0_i32_38 : i32
    %163 = arith.index_cast %162 : i32 to index
    %164 = memref.load %arg4[%163] : memref<48xf32, #tpu.memory_space<smem>>
    %c12_i32_39 = arith.constant 12 : i32
    %165 = arith.addi %4, %c12_i32_39 : i32
    %c1_i32_40 = arith.constant 1 : i32
    %166 = arith.addi %165, %c1_i32_40 : i32
    %167 = arith.index_cast %166 : i32 to index
    %168 = memref.load %arg4[%167] : memref<48xf32, #tpu.memory_space<smem>>
    %c12_i32_41 = arith.constant 12 : i32
    %169 = arith.addi %4, %c12_i32_41 : i32
    %c2_i32_42 = arith.constant 2 : i32
    %170 = arith.addi %169, %c2_i32_42 : i32
    %171 = arith.index_cast %170 : i32 to index
    %172 = memref.load %arg4[%171] : memref<48xf32, #tpu.memory_space<smem>>
    %c12_i32_43 = arith.constant 12 : i32
    %173 = arith.addi %4, %c12_i32_43 : i32
    %c3_i32_44 = arith.constant 3 : i32
    %174 = arith.addi %173, %c3_i32_44 : i32
    %175 = arith.index_cast %174 : i32 to index
    %176 = memref.load %arg4[%175] : memref<48xf32, #tpu.memory_space<smem>>
    %c3_i32_45 = arith.constant 3 : i32
    %177 = arith.addi %5, %c3_i32_45 : i32
    %178 = arith.index_cast %177 : i32 to index
    %179 = memref.load %arg5[%178] : memref<12xf32, #tpu.memory_space<smem>>
    %180 = vector.broadcast %164 : f32 to vector<8x128xf32>
    %181 = arith.subf %1, %180 : vector<8x128xf32>
    %182 = vector.broadcast %168 : f32 to vector<8x128xf32>
    %183 = arith.subf %3, %182 : vector<8x128xf32>
    %184 = vector.broadcast %172 : f32 to vector<8x128xf32>
    %185 = arith.subf %184, %1 : vector<8x128xf32>
    %186 = vector.broadcast %176 : f32 to vector<8x128xf32>
    %187 = arith.subf %186, %3 : vector<8x128xf32>
    %188 = arith.minimumf %181, %183 : vector<8x128xf32>
    %189 = arith.minimumf %185, %187 : vector<8x128xf32>
    %190 = arith.minimumf %188, %189 : vector<8x128xf32>
    %191 = arith.maximumf %181, %183 : vector<8x128xf32>
    %192 = arith.maximumf %185, %187 : vector<8x128xf32>
    %193 = arith.maximumf %191, %192 : vector<8x128xf32>
    %cst_46 = arith.constant 0.000000e+00 : f32
    %194 = vector.broadcast %cst_46 : f32 to vector<8x128xf32>
    %195 = arith.cmpf ogt, %190, %194 : vector<8x128xf32>
    %cst_47 = arith.constant -1.000000e+00 : f32
    %196 = vector.broadcast %cst_47 : f32 to vector<8x128xf32>
    %197 = arith.cmpf oge, %193, %196 : vector<8x128xf32>
    %198 = arith.andi %195, %197 : vector<8x128xi1>
    %cst_48 = arith.constant 6.400000e+01 : f32
    %199 = vector.broadcast %cst_48 : f32 to vector<8x128xf32>
    %200 = arith.cmpf ole, %193, %199 : vector<8x128xf32>
    %201 = arith.andi %198, %200 : vector<8x128xi1>
    %202 = vector.broadcast %179 : f32 to vector<8x128xf32>
    %203 = arith.cmpf olt, %202, %156 : vector<8x128xf32>
    %204 = arith.andi %201, %203 : vector<8x128xi1>
    %205 = vector.broadcast %179 : f32 to vector<8x128xf32>
    %206 = arith.select %204, %205, %156 : vector<8x128xi1>, vector<8x128xf32>
    %207 = arith.select %204, %181, %157 : vector<8x128xi1>, vector<8x128xf32>
    %208 = arith.select %204, %183, %158 : vector<8x128xi1>, vector<8x128xf32>
    %209 = arith.select %204, %185, %159 : vector<8x128xi1>, vector<8x128xf32>
    %210 = arith.select %204, %187, %160 : vector<8x128xi1>, vector<8x128xf32>
    %c16_i32 = arith.constant 16 : i32
    %211 = arith.addi %4, %c16_i32 : i32
    %c0_i32_49 = arith.constant 0 : i32
    %212 = arith.addi %211, %c0_i32_49 : i32
    %213 = arith.index_cast %212 : i32 to index
    %214 = memref.load %arg4[%213] : memref<48xf32, #tpu.memory_space<smem>>
    %c16_i32_50 = arith.constant 16 : i32
    %215 = arith.addi %4, %c16_i32_50 : i32
    %c1_i32_51 = arith.constant 1 : i32
    %216 = arith.addi %215, %c1_i32_51 : i32
    %217 = arith.index_cast %216 : i32 to index
    %218 = memref.load %arg4[%217] : memref<48xf32, #tpu.memory_space<smem>>
    %c16_i32_52 = arith.constant 16 : i32
    %219 = arith.addi %4, %c16_i32_52 : i32
    %c2_i32_53 = arith.constant 2 : i32
    %220 = arith.addi %219, %c2_i32_53 : i32
    %221 = arith.index_cast %220 : i32 to index
    %222 = memref.load %arg4[%221] : memref<48xf32, #tpu.memory_space<smem>>
    %c16_i32_54 = arith.constant 16 : i32
    %223 = arith.addi %4, %c16_i32_54 : i32
    %c3_i32_55 = arith.constant 3 : i32
    %224 = arith.addi %223, %c3_i32_55 : i32
    %225 = arith.index_cast %224 : i32 to index
    %226 = memref.load %arg4[%225] : memref<48xf32, #tpu.memory_space<smem>>
    %c4_i32_56 = arith.constant 4 : i32
    %227 = arith.addi %5, %c4_i32_56 : i32
    %228 = arith.index_cast %227 : i32 to index
    %229 = memref.load %arg5[%228] : memref<12xf32, #tpu.memory_space<smem>>
    %230 = vector.broadcast %214 : f32 to vector<8x128xf32>
    %231 = arith.subf %1, %230 : vector<8x128xf32>
    %232 = vector.broadcast %218 : f32 to vector<8x128xf32>
    %233 = arith.subf %3, %232 : vector<8x128xf32>
    %234 = vector.broadcast %222 : f32 to vector<8x128xf32>
    %235 = arith.subf %234, %1 : vector<8x128xf32>
    %236 = vector.broadcast %226 : f32 to vector<8x128xf32>
    %237 = arith.subf %236, %3 : vector<8x128xf32>
    %238 = arith.minimumf %231, %233 : vector<8x128xf32>
    %239 = arith.minimumf %235, %237 : vector<8x128xf32>
    %240 = arith.minimumf %238, %239 : vector<8x128xf32>
    %241 = arith.maximumf %231, %233 : vector<8x128xf32>
    %242 = arith.maximumf %235, %237 : vector<8x128xf32>
    %243 = arith.maximumf %241, %242 : vector<8x128xf32>
    %cst_57 = arith.constant 0.000000e+00 : f32
    %244 = vector.broadcast %cst_57 : f32 to vector<8x128xf32>
    %245 = arith.cmpf ogt, %240, %244 : vector<8x128xf32>
    %cst_58 = arith.constant -1.000000e+00 : f32
    %246 = vector.broadcast %cst_58 : f32 to vector<8x128xf32>
    %247 = arith.cmpf oge, %243, %246 : vector<8x128xf32>
    %248 = arith.andi %245, %247 : vector<8x128xi1>
    %cst_59 = arith.constant 6.400000e+01 : f32
    %249 = vector.broadcast %cst_59 : f32 to vector<8x128xf32>
    %250 = arith.cmpf ole, %243, %249 : vector<8x128xf32>
    %251 = arith.andi %248, %250 : vector<8x128xi1>
    %252 = vector.broadcast %229 : f32 to vector<8x128xf32>
    %253 = arith.cmpf olt, %252, %206 : vector<8x128xf32>
    %254 = arith.andi %251, %253 : vector<8x128xi1>
    %255 = vector.broadcast %229 : f32 to vector<8x128xf32>
    %256 = arith.select %254, %255, %206 : vector<8x128xi1>, vector<8x128xf32>
    %257 = arith.select %254, %231, %207 : vector<8x128xi1>, vector<8x128xf32>
    %258 = arith.select %254, %233, %208 : vector<8x128xi1>, vector<8x128xf32>
    %259 = arith.select %254, %235, %209 : vector<8x128xi1>, vector<8x128xf32>
    %260 = arith.select %254, %237, %210 : vector<8x128xi1>, vector<8x128xf32>
    %c20_i32 = arith.constant 20 : i32
    %261 = arith.addi %4, %c20_i32 : i32
    %c0_i32_60 = arith.constant 0 : i32
    %262 = arith.addi %261, %c0_i32_60 : i32
    %263 = arith.index_cast %262 : i32 to index
    %264 = memref.load %arg4[%263] : memref<48xf32, #tpu.memory_space<smem>>
    %c20_i32_61 = arith.constant 20 : i32
    %265 = arith.addi %4, %c20_i32_61 : i32
    %c1_i32_62 = arith.constant 1 : i32
    %266 = arith.addi %265, %c1_i32_62 : i32
    %267 = arith.index_cast %266 : i32 to index
    %268 = memref.load %arg4[%267] : memref<48xf32, #tpu.memory_space<smem>>
    %c20_i32_63 = arith.constant 20 : i32
    %269 = arith.addi %4, %c20_i32_63 : i32
    %c2_i32_64 = arith.constant 2 : i32
    %270 = arith.addi %269, %c2_i32_64 : i32
    %271 = arith.index_cast %270 : i32 to index
    %272 = memref.load %arg4[%271] : memref<48xf32, #tpu.memory_space<smem>>
    %c20_i32_65 = arith.constant 20 : i32
    %273 = arith.addi %4, %c20_i32_65 : i32
    %c3_i32_66 = arith.constant 3 : i32
    %274 = arith.addi %273, %c3_i32_66 : i32
    %275 = arith.index_cast %274 : i32 to index
    %276 = memref.load %arg4[%275] : memref<48xf32, #tpu.memory_space<smem>>
    %c5_i32 = arith.constant 5 : i32
    %277 = arith.addi %5, %c5_i32 : i32
    %278 = arith.index_cast %277 : i32 to index
    %279 = memref.load %arg5[%278] : memref<12xf32, #tpu.memory_space<smem>>
    %280 = vector.broadcast %264 : f32 to vector<8x128xf32>
    %281 = arith.subf %1, %280 : vector<8x128xf32>
    %282 = vector.broadcast %268 : f32 to vector<8x128xf32>
    %283 = arith.subf %3, %282 : vector<8x128xf32>
    %284 = vector.broadcast %272 : f32 to vector<8x128xf32>
    %285 = arith.subf %284, %1 : vector<8x128xf32>
    %286 = vector.broadcast %276 : f32 to vector<8x128xf32>
    %287 = arith.subf %286, %3 : vector<8x128xf32>
    %288 = arith.minimumf %281, %283 : vector<8x128xf32>
    %289 = arith.minimumf %285, %287 : vector<8x128xf32>
    %290 = arith.minimumf %288, %289 : vector<8x128xf32>
    %291 = arith.maximumf %281, %283 : vector<8x128xf32>
    %292 = arith.maximumf %285, %287 : vector<8x128xf32>
    %293 = arith.maximumf %291, %292 : vector<8x128xf32>
    %cst_67 = arith.constant 0.000000e+00 : f32
    %294 = vector.broadcast %cst_67 : f32 to vector<8x128xf32>
    %295 = arith.cmpf ogt, %290, %294 : vector<8x128xf32>
    %cst_68 = arith.constant -1.000000e+00 : f32
    %296 = vector.broadcast %cst_68 : f32 to vector<8x128xf32>
    %297 = arith.cmpf oge, %293, %296 : vector<8x128xf32>
    %298 = arith.andi %295, %297 : vector<8x128xi1>
    %cst_69 = arith.constant 6.400000e+01 : f32
    %299 = vector.broadcast %cst_69 : f32 to vector<8x128xf32>
    %300 = arith.cmpf ole, %293, %299 : vector<8x128xf32>
    %301 = arith.andi %298, %300 : vector<8x128xi1>
    %302 = vector.broadcast %279 : f32 to vector<8x128xf32>
    %303 = arith.cmpf olt, %302, %256 : vector<8x128xf32>
    %304 = arith.andi %301, %303 : vector<8x128xi1>
    %305 = vector.broadcast %279 : f32 to vector<8x128xf32>
    %306 = arith.select %304, %305, %256 : vector<8x128xi1>, vector<8x128xf32>
    %307 = arith.select %304, %281, %257 : vector<8x128xi1>, vector<8x128xf32>
    %308 = arith.select %304, %283, %258 : vector<8x128xi1>, vector<8x128xf32>
    %309 = arith.select %304, %285, %259 : vector<8x128xi1>, vector<8x128xf32>
    %310 = arith.select %304, %287, %260 : vector<8x128xi1>, vector<8x128xf32>
    %cst_70 = arith.constant 1.000000e+08 : f32
    %311 = vector.broadcast %cst_70 : f32 to vector<8x128xf32>
    %312 = arith.cmpf olt, %306, %311 : vector<8x128xf32>
    %313 = tpu.iota {dimensions = array<i32: 0>} : vector<8x128xi32>
    %314 = tpu.iota {dimensions = array<i32: 1>} : vector<8x128xi32>
    %c8_i32_71 = arith.constant 8 : i32
    %315 = arith.muli %arg0, %c8_i32_71 : i32
    %316 = vector.broadcast %315 : i32 to vector<8x128xi32>
    %317 = arith.addi %316, %313 : vector<8x128xi32>
    %c128_i32 = arith.constant 128 : i32
    %318 = vector.broadcast %c128_i32 : i32 to vector<8x128xi32>
    %319 = arith.muli %317, %318 : vector<8x128xi32>
    %320 = arith.addi %319, %314 : vector<8x128xi32>
    %c256_i32 = arith.constant 256 : i32
    %321 = vector.broadcast %c256_i32 : i32 to vector<8x128xi32>
    %322 = arith.cmpi slt, %320, %321 : vector<8x128xi32>
    %323 = arith.andi %312, %322 : vector<8x128xi1>
    %c0_72 = arith.constant 0 : index
    %c0_73 = arith.constant 0 : index
    %c0_74 = arith.constant 0 : index
    %c0_75 = arith.constant 0 : index
    %324 = vector.load %arg3[%c0_72, %c0_73, %c0_74, %c0_75] : memref<1x4x8x128xf32, #tpu.memory_space<vmem>>, vector<1x4x8x128xf32>
    %325 = vector.shape_cast %324 : vector<1x4x8x128xf32> to vector<4x8x128xf32>
    %326 = vector.extract_strided_slice %325 {offsets = [0, 0, 0], sizes = [1, 8, 128], strides = [1, 1, 1]} : vector<4x8x128xf32> to vector<1x8x128xf32>
    %327 = vector.shape_cast %326 : vector<1x8x128xf32> to vector<8x128xf32>
    %328 = vector.extract_strided_slice %325 {offsets = [1, 0, 0], sizes = [1, 8, 128], strides = [1, 1, 1]} : vector<4x8x128xf32> to vector<1x8x128xf32>
    %329 = vector.shape_cast %328 : vector<1x8x128xf32> to vector<8x128xf32>
    %330 = vector.extract_strided_slice %325 {offsets = [2, 0, 0], sizes = [1, 8, 128], strides = [1, 1, 1]} : vector<4x8x128xf32> to vector<1x8x128xf32>
    %331 = vector.shape_cast %330 : vector<1x8x128xf32> to vector<8x128xf32>
    %332 = vector.extract_strided_slice %325 {offsets = [3, 0, 0], sizes = [1, 8, 128], strides = [1, 1, 1]} : vector<4x8x128xf32> to vector<1x8x128xf32>
    %333 = vector.shape_cast %332 : vector<1x8x128xf32> to vector<8x128xf32>
    %334 = arith.addf %307, %309 : vector<8x128xf32>
    %335 = arith.addf %308, %310 : vector<8x128xf32>
    %336 = arith.mulf %334, %335 : vector<8x128xf32>
    %337 = arith.addf %327, %331 : vector<8x128xf32>
    %338 = arith.addf %329, %333 : vector<8x128xf32>
    %339 = arith.mulf %337, %338 : vector<8x128xf32>
    %340 = arith.minimumf %327, %307 : vector<8x128xf32>
    %341 = arith.minimumf %331, %309 : vector<8x128xf32>
    %342 = arith.addf %340, %341 : vector<8x128xf32>
    %343 = arith.minimumf %333, %310 : vector<8x128xf32>
    %344 = arith.minimumf %329, %308 : vector<8x128xf32>
    %345 = arith.addf %343, %344 : vector<8x128xf32>
    %346 = arith.mulf %342, %345 : vector<8x128xf32>
    %347 = arith.addf %336, %339 : vector<8x128xf32>
    %348 = arith.subf %347, %346 : vector<8x128xf32>
    %cst_76 = arith.constant 1.000000e+00 : f32
    %349 = vector.broadcast %cst_76 : f32 to vector<8x128xf32>
    %350 = arith.addf %346, %349 : vector<8x128xf32>
    %cst_77 = arith.constant 1.000000e+00 : f32
    %351 = vector.broadcast %cst_77 : f32 to vector<8x128xf32>
    %352 = arith.addf %348, %351 : vector<8x128xf32>
    %353 = arith.divf %350, %352 : vector<8x128xf32>
    %354 = arith.maximumf %327, %307 : vector<8x128xf32>
    %355 = arith.maximumf %331, %309 : vector<8x128xf32>
    %356 = arith.addf %354, %355 : vector<8x128xf32>
    %357 = arith.maximumf %333, %310 : vector<8x128xf32>
    %358 = arith.maximumf %329, %308 : vector<8x128xf32>
    %359 = arith.addf %357, %358 : vector<8x128xf32>
    %360 = arith.mulf %356, %359 : vector<8x128xf32>
    %cst_78 = arith.constant 1.000000e-07 : f32
    %361 = vector.broadcast %cst_78 : f32 to vector<8x128xf32>
    %362 = arith.addf %360, %361 : vector<8x128xf32>
    %363 = arith.subf %362, %348 : vector<8x128xf32>
    %364 = arith.divf %363, %362 : vector<8x128xf32>
    %365 = arith.subf %353, %364 : vector<8x128xf32>
    %cst_79 = arith.constant 1.000000e+00 : f32
    %366 = vector.broadcast %cst_79 : f32 to vector<8x128xf32>
    %367 = arith.subf %366, %365 : vector<8x128xf32>
    %368 = arith.minimumf %307, %309 : vector<8x128xf32>
    %369 = arith.maximumf %307, %309 : vector<8x128xf32>
    %370 = arith.minimumf %308, %310 : vector<8x128xf32>
    %371 = arith.maximumf %308, %310 : vector<8x128xf32>
    %372 = arith.mulf %368, %370 : vector<8x128xf32>
    %373 = math.sqrt %372 : vector<8x128xf32>
    %374 = arith.mulf %369, %371 : vector<8x128xf32>
    %cst_80 = arith.constant 9.99999996E-13 : f32
    %375 = vector.broadcast %cst_80 : f32 to vector<8x128xf32>
    %376 = arith.maximumf %374, %375 : vector<8x128xf32>
    %377 = math.rsqrt %376 : vector<8x128xf32>
    %378 = arith.mulf %373, %377 : vector<8x128xf32>
    %cst_81 = arith.constant 0.000000e+00 : f32
    %379 = vector.broadcast %cst_81 : f32 to vector<8x128xf32>
    %380 = arith.select %323, %378, %379 : vector<8x128xi1>, vector<8x128xf32>
    %cst_82 = arith.constant 0.000000e+00 : f32
    %381 = vector.broadcast %cst_82 : f32 to vector<8x128xf32>
    %382 = arith.select %323, %367, %381 : vector<8x128xi1>, vector<8x128xf32>
    %383 = arith.mulf %382, %380 : vector<8x128xf32>
    %cst_83 = arith.constant dense<0.000000e+00> : vector<128xf32>
    %384 = vector.multi_reduction <add>, %383, %cst_83 [0] : vector<8x128xf32> to vector<128xf32>
    %385 = vector.shape_cast %384 : vector<128xf32> to vector<1x128xf32>
    %cst_84 = arith.constant dense<0.000000e+00> : vector<128xf32>
    %386 = vector.multi_reduction <add>, %380, %cst_84 [0] : vector<8x128xf32> to vector<128xf32>
    %387 = vector.shape_cast %386 : vector<128xf32> to vector<1x128xf32>
    %cst_85 = arith.constant dense<0.000000e+00> : vector<128xf32>
    %388 = vector.multi_reduction <add>, %382, %cst_85 [0] : vector<8x128xf32> to vector<128xf32>
    %389 = vector.shape_cast %388 : vector<128xf32> to vector<1x128xf32>
    %390 = arith.extui %323 : vector<8x128xi1> to vector<8x128xi32>
    %391 = arith.sitofp %390 : vector<8x128xi32> to vector<8x128xf32>
    %cst_86 = arith.constant dense<0.000000e+00> : vector<128xf32>
    %392 = vector.multi_reduction <add>, %391, %cst_86 [0] : vector<8x128xf32> to vector<128xf32>
    %393 = vector.shape_cast %392 : vector<128xf32> to vector<1x128xf32>
    %cst_87 = arith.constant 0.000000e+00 : f32
    %394 = vector.broadcast %cst_87 : f32 to vector<4x128xf32>
    %395 = tpu.concatenate %385, %387, %389, %393, %394 in 0 : vector<1x128xf32>, vector<1x128xf32>, vector<1x128xf32>, vector<1x128xf32>, vector<4x128xf32> -> vector<8x128xf32>
    %c0_88 = arith.constant 0 : index
    %c0_89 = arith.constant 0 : index
    %c0_90 = arith.constant 0 : index
    %c0_91 = arith.constant 0 : index
    %396 = vector.load %arg6[%c0_88, %c0_89, %c0_90, %c0_91] : memref<1x1x8x128xf32, #tpu.memory_space<vmem>>, vector<1x1x8x128xf32>
    %397 = vector.shape_cast %396 : vector<1x1x8x128xf32> to vector<8x128xf32>
    %398 = vector.shape_cast %395 : vector<8x128xf32> to vector<1x1x8x128xf32>
    tpu.vector_store %arg6[%c0_88, %c0_89, %c0_90, %c0_91], %398 {strides = array<i32>} : memref<1x1x8x128xf32, #tpu.memory_space<vmem>>, vector<1x1x8x128xf32>,
    return
  }
  func.func @transform_0(%arg0: i32, %arg1: i32) -> (i32, i32, i32) {
    %c0_i32 = arith.constant 0 : i32
    %c0_i32_0 = arith.constant 0 : i32
    %c0_i32_1 = arith.constant 0 : i32
    return %c0_i32, %arg0, %c0_i32_0 : i32, i32, i32
  }
  func.func @transform_1(%arg0: i32, %arg1: i32) -> (i32, i32, i32, i32) {
    %c0_i32 = arith.constant 0 : i32
    %c0_i32_0 = arith.constant 0 : i32
    %c0_i32_1 = arith.constant 0 : i32
    return %arg1, %c0_i32, %arg0, %c0_i32_0 : i32, i32, i32, i32
  }
  func.func @transform_2(%arg0: i32, %arg1: i32) -> i32 {
    %c0_i32 = arith.constant 0 : i32
    %c0_i32_0 = arith.constant 0 : i32
    return %c0_i32 : i32
  }
  func.func @transform_3(%arg0: i32, %arg1: i32) -> i32 {
    %c0_i32 = arith.constant 0 : i32
    %c0_i32_0 = arith.constant 0 : i32
    return %c0_i32 : i32
  }
  func.func @transform_4(%arg0: i32, %arg1: i32) -> (i32, i32, i32, i32) {
    %c0_i32 = arith.constant 0 : i32
    %c0_i32_0 = arith.constant 0 : i32
    %c0_i32_1 = arith.constant 0 : i32
    return %arg0, %arg1, %c0_i32, %c0_i32_0 : i32, i32, i32, i32
  }
}

</mosaic_0001>

<llo_original>
// kernel: tpu_custom_call.1
$region0: #{tpu_custom_call.1}
  #allocation0 [shape = 'u32[]', space=smem, size = 0x4, offset = 0x4, fixed_abs, tag = 'smem constant byte address 0x4 - core index']
  #allocation1 [shape = 'u32[144,128]{1,0:T(1,128)}', space=vmem, size = 0x12000, scoped, tag = 'internal scratch']
  %s0 = inlined_call_operand.hbm [shape: f32[2,8,128], index: 0, kind: input, shape index: {}]
  %s1 = inlined_call_operand.hbm [shape: f32[2,4,8,128], index: 1, kind: input, shape index: {}]
  %s2 = inlined_call_operand.vmem [shape: f32[48], index: 2, kind: input, shape index: {}]
  %s3 = inlined_call_operand.vmem [shape: f32[12], index: 3, kind: input, shape index: {}]
  %s4 = inlined_call_operand.hbm [shape: f32[1,2,8,128], index: 4, kind: output, shape index: {}]
  %s5 = sld [smem:[#allocation0]]
  $region65: #{tpu_custom_call.1} parent=0
    _
  %s7 = ssub.s32 1, %s5
  %s8 = scalar_select 0, %s7, %s5
  $region1: #{tpu_custom_call.1} parent=0
    #allocation2 [shape = 'u8[8192]{0}', space=vmem, size = 0x2000, scoped, tag = 'input window, operand 0, single buffered']
    #allocation3 [shape = 's32[2]{0}', space=sflag, size = 0x8, scoped, tag = 'scoped memory for tpu_custom_call.1']
    #allocation4 [shape = 's32[2]{0}', space=sflag, size = 0x8, scoped, tag = 'scoped memory for tpu_custom_call.1']
    #allocation5 [shape = 's32[2]{0}', space=sflag, size = 0x8, scoped, tag = 'scoped memory for tpu_custom_call.1']
    #allocation6 [shape = 'u8[32768]{0}', space=vmem, size = 0x8000, scoped, tag = 'input window, operand 1']
    #allocation7 [shape = 's32[2]{0}', space=sflag, size = 0x8, scoped, tag = 'scoped memory for tpu_custom_call.1']
    #allocation8 [shape = 'u8[512]{0}', space=smem, size = 0x200, scoped, tag = 'input window, operand 2, single buffered']
    #allocation9 [shape = 'u8[512]{0}', space=smem, size = 0x200, scoped, tag = 'input window, operand 3, single buffered']
    #allocation10 [shape = 's32[1]{0}', space=sflag, size = 0x4, scoped, tag = 'scoped memory for tpu_custom_call.1']
    #allocation11 [shape = 'u8[8192]{0}', space=vmem, size = 0x2000, scoped, tag = 'output window, operand 0']
    %9 = vsyncpa [#allocation3], 0
    %10 = vsyncpa [#allocation7], 0
    %s11 = scalar_lea.sflag [#allocation7], 1
    %12 = vsyncpa %s11, 0
    %13 = vsyncpa [#allocation5], 0
    %14 = vsyncpa [#allocation10], 0
    %15 = vsyncpa [#allocation4], 0
    %s16 = scalar_lea.sflag [#allocation4], 1
    %17 = vsyncpa %s16, 0
    loop: start=0, step=1, limit=4
    $region2: #{tpu_custom_call.1} parent=1 // loop_pre_header
      _
    $region3: #{tpu_custom_call.1} parent=1 // loop_header
      %s19 = sphi 0, %s23
      %p20 = scmp.ge.s32.totalorder %s19, 4
      %s26 = sphi 0, %s38
      %s27 = sphi 0, %s34
      %s28 = sphi 0, %s26
      %s29 = sphi 0, %s27
      %s30 = sphi 0, %s28
      %s31 = sphi 0, %s29
      %s41 = sphi 0, %s43
      %s44 = sphi 0, %s41
      %s45 = sphi 0, %s44
      %s61 = sphi 0, %s45
      %s69 = sphi 0, %s71
      %s72 = sphi 0, %s69
      %s73 = sphi 0, %s72
      %s89 = sphi 0, %s73
      %s93 = sphi 0, %s93
      %s95 = sphi 0, %s93
      %s96 = sphi 0, %s95
      %s110 = sphi 0, %s96
      %s114 = sphi 0, %s114
      %s116 = sphi 0, %s114
      %s117 = sphi 0, %s116
      %s131 = sphi 0, %s117
      %s139 = sphi 0, %s141
      %s142 = sphi 0, %s139
      %s143 = sphi 0, %s142
      %s159 = sphi 0, %s143
    $region4: #{tpu_custom_call.1} parent=1 // loop_header_branch
      %22 = sbr.rel (%p20) target = $region8
    $region5: #{tpu_custom_call.1} parent=1 // loop_body
      %s24 = ssub.s32 %s19, 1
      %s25 = ssub.s32 %s19, 2
      %s32 = sadd.s32 1, %s27
      %p33 = scmp.ge.s32.totalorder %s32, 2
      %s34 = scalar_select %p33, 0, %s32
      %s35 = sadd.s32 1, %s26
      %s36 = scalar_select %p33, %s35, %s26
      %p37 = scmp.ge.s32.totalorder %s36, 1
      %s38 = scalar_select %p37, 0, %s36
      %s39 = ssub.s32 %s26, %s38
      %p40 = scmp.eq.s32.totalorder %s39, 0
      %s42 = sadd.s32 %s41, 1
      %s43 = scalar_select %p40, %s41, %s42
      %p46 = pneg %p40
      %p47 = scmp.eq.s32.totalorder %s19, 1
      %p48 = por %p46, %p47
      %p49 = scmp.ne.s32.totalorder %s41, %s44
      %p50 = scmp.eq.s32.totalorder %s19, 0
      %p51 = por %p49, %p50
      %p52 = scmp.ne.s32.totalorder %s41, %s44
      %p53 = scmp.eq.s32.totalorder %s24, 1
      %p54 = por %p52, %p53
      %p55 = scmp.ne.s32.totalorder %s44, %s45
      %p56 = scmp.eq.s32.totalorder %s24, 0
      %p57 = por %p55, %p56
      %p58 = scmp.ne.s32.totalorder %s44, %s45
      %p59 = scmp.eq.s32.totalorder %s25, 1
      %p60 = por %p58, %p59
      %p62 = scmp.ne.s32.totalorder %s45, %s61
      %p63 = scmp.eq.s32.totalorder %s25, 0
      %p64 = por %p62, %p63
      %s65 = ssub.s32 %s27, %s34
      %s66 = ssub.s32 %s26, %s38
      %s67 = sor.u32 %s65, %s66
      %p68 = scmp.eq.s32.totalorder %s67, 0
      %s70 = sadd.s32 %s69, 1
      %s71 = scalar_select %p68, %s69, %s70
      %p74 = pneg %p68
      %p75 = scmp.eq.s32.totalorder %s19, 1
      %p76 = por %p74, %p75
      %p77 = scmp.ne.s32.totalorder %s69, %s72
      %p78 = scmp.eq.s32.totalorder %s19, 0
      %p79 = por %p77, %p78
      %p80 = scmp.ne.s32.totalorder %s69, %s72
      %p81 = scmp.eq.s32.totalorder %s24, 1
      %p82 = por %p80, %p81
      %p83 = scmp.ne.s32.totalorder %s72, %s73
      %p84 = scmp.eq.s32.totalorder %s24, 0
      %p85 = por %p83, %p84
      %p86 = scmp.ne.s32.totalorder %s72, %s73
      %p87 = scmp.eq.s32.totalorder %s25, 1
      %p88 = por %p86, %p87
      %p90 = scmp.ne.s32.totalorder %s73, %s89
      %p91 = scmp.eq.s32.totalorder %s25, 0
      %p92 = por %p90, %p91
      %s94 = sadd.s32 %s93, 1
      %p97 = scmp.eq.s32.totalorder %s19, 1
      %p98 = scmp.ne.s32.totalorder %s93, %s95
      %p99 = scmp.eq.s32.totalorder %s19, 0
      %p100 = por %p98, %p99
      %p101 = scmp.ne.s32.totalorder %s93, %s95
      %p102 = scmp.eq.s32.totalorder %s24, 1
      %p103 = por %p101, %p102
      %p104 = scmp.ne.s32.totalorder %s95, %s96
      %p105 = scmp.eq.s32.totalorder %s24, 0
      %p106 = por %p104, %p105
      %p107 = scmp.ne.s32.totalorder %s95, %s96
      %p108 = scmp.eq.s32.totalorder %s25, 1
      %p109 = por %p107, %p108
      %p111 = scmp.ne.s32.totalorder %s96, %s110
      %p112 = scmp.eq.s32.totalorder %s25, 0
      %p113 = por %p111, %p112
      %s115 = sadd.s32 %s114, 1
      %p118 = scmp.eq.s32.totalorder %s19, 1
      %p119 = scmp.ne.s32.totalorder %s114, %s116
      %p120 = scmp.eq.s32.totalorder %s19, 0
      %p121 = por %p119, %p120
      %p122 = scmp.ne.s32.totalorder %s114, %s116
      %p123 = scmp.eq.s32.totalorder %s24, 1
      %p124 = por %p122, %p123
      %p125 = scmp.ne.s32.totalorder %s116, %s117
      %p126 = scmp.eq.s32.totalorder %s24, 0
      %p127 = por %p125, %p126
      %p128 = scmp.ne.s32.totalorder %s116, %s117
      %p129 = scmp.eq.s32.totalorder %s25, 1
      %p130 = por %p128, %p129
      %p132 = scmp.ne.s32.totalorder %s117, %s131
      %p133 = scmp.eq.s32.totalorder %s25, 0
      %p134 = por %p132, %p133
      %s135 = ssub.s32 %s26, %s38
      %s136 = ssub.s32 %s27, %s34
      %s137 = sor.u32 %s135, %s136
      %p138 = scmp.eq.s32.totalorder %s137, 0
      %s140 = sadd.s32 %s139, 1
      %s141 = scalar_select %p138, %s139, %s140
      %p144 = pneg %p138
      %p145 = scmp.eq.s32.totalorder %s19, 1
      %p146 = por %p144, %p145
      %p147 = scmp.ne.s32.totalorder %s139, %s142
      %p148 = scmp.eq.s32.totalorder %s19, 0
      %p149 = por %p147, %p148
      %p150 = scmp.ne.s32.totalorder %s139, %s142
      %p151 = scmp.eq.s32.totalorder %s24, 1
      %p152 = por %p150, %p151
      %p153 = scmp.ne.s32.totalorder %s142, %s143
      %p154 = scmp.eq.s32.totalorder %s24, 0
      %p155 = por %p153, %p154
      %p156 = scmp.ne.s32.totalorder %s142, %s143
      %p157 = scmp.eq.s32.totalorder %s25, 1
      %p158 = por %p156, %p157
      %p160 = scmp.ne.s32.totalorder %s143, %s159
      %p161 = scmp.eq.s32.totalorder %s25, 0
      %p162 = por %p160, %p161
      %p163 = scmp.le.s32.totalorder 1, %s19
      %p164 = scmp.lt.s32.totalorder %s19, 3
      %p165 = pnand %p163, %p164
      %p166 = pneg %p165
      // Predicated region
      $region9: #{tpu_custom_call.1} parent=5 // pred_check
        _
      $region10: #{tpu_custom_call.1} parent=5 // pred_check_branch
        %168 = sbr.rel (%p165) target = $region12
      $region11: #{tpu_custom_call.1} parent=5 // pred_region
        %s169 = ssub.s32 %s19, 1
        // Predicated region
        $region13: #{tpu_custom_call.1} parent=11 // pred_check
          %p170 = pneg %p57
        $region14: #{tpu_custom_call.1} parent=11 // pred_check_branch
          %172 = sbr.rel (%p170) target = $region16
        $region15: #{tpu_custom_call.1} parent=11 // pred_region
          %s174 = ssub.s32 256, 256
          %175 = vsyncadd [#allocation3], %s174
          %s176 = smul.addr %s28, 128
          %s177 = scalar_lea.hbm %s0, %s176
          %s178 = sshll.u32 [#allocation2], 4
          %s179 = int_to_ptr.vmem [resolvable:$true] %s178
          %184 = dma.hbm_to_vmem [thread:$0]  %s177, 256, %s179, [#allocation3], 128, 128, 8
        $region16: #{tpu_custom_call.1} parent=11 // pred_fallthru
          _
        // Predicated region
        $region17: #{tpu_custom_call.1} parent=11 // pred_check
          %p185 = pneg %p106
        $region18: #{tpu_custom_call.1} parent=11 // pred_check_branch
          %187 = sbr.rel (%p185) target = $region20
        $region19: #{tpu_custom_call.1} parent=11 // pred_region
          %s189 = ssub.s32 16, 16
          %190 = vsyncadd [#allocation5], %s189
          %s192 = sshll.u32 %s2, 4
          %s193 = int_to_ptr.vmem [resolvable:$true] %s192
          %195 = dma.vmem_to_smem %s193, 16, [#allocation8], [#allocation5]
        $region20: #{tpu_custom_call.1} parent=11 // pred_fallthru
          _
        // Predicated region
        $region21: #{tpu_custom_call.1} parent=11 // pred_check
          %p196 = pneg %p127
        $region22: #{tpu_custom_call.1} parent=11 // pred_check_branch
          %198 = sbr.rel (%p196) target = $region24
        $region23: #{tpu_custom_call.1} parent=11 // pred_region
          %s200 = ssub.s32 16, 16
          %201 = vsyncadd [#allocation10], %s200
          %s203 = sshll.u32 %s3, 4
          %s204 = int_to_ptr.vmem [resolvable:$true] %s203
          %206 = dma.vmem_to_smem %s204, 16, [#allocation9], [#allocation10]
        $region24: #{tpu_custom_call.1} parent=11 // pred_fallthru
          _
      $region12: #{tpu_custom_call.1} parent=5 // pred_fallthru
        _
      %p207 = scmp.lt.s32.totalorder %s19, 2
      // Predicated region
      $region25: #{tpu_custom_call.1} parent=5 // pred_check
        %p208 = pneg %p207
      $region26: #{tpu_custom_call.1} parent=5 // pred_check_branch
        %210 = sbr.rel (%p208) target = $region28
      $region27: #{tpu_custom_call.1} parent=5 // pred_region
        // Predicated region
        $region29: #{tpu_custom_call.1} parent=27 // pred_check
          %p211 = pneg %p79
        $region30: #{tpu_custom_call.1} parent=27 // pred_check_branch
          %213 = sbr.rel (%p211) target = $region32
        $region31: #{tpu_custom_call.1} parent=27 // pred_region
          %s214 = sand.u32 %s69, 1
          %s215 = scalar_lea.sflag [#allocation7], %s214
          %s216 = sand.u32 %s69, 1
          %s217 = smul.addr %s216, 32
          %s218 = scalar_lea.vmem [#allocation6], %s217
          %s220 = ssub.s32 512, 512
          %221 = vsyncadd %s215, %s220
          %s222 = smul.addr %s27, 4
          %s223 = sadd.s32 %s26, %s222
          %s224 = smul.addr %s223, 128
          %s225 = scalar_lea.hbm %s1, %s224
          %s226 = sshll.u32 %s218, 4
          %s227 = int_to_ptr.vmem [resolvable:$true] %s226
          %232 = dma.hbm_to_vmem [thread:$0]  %s225, 512, %s227, %s215, 128, 128, 8
        $region32: #{tpu_custom_call.1} parent=27 // pred_fallthru
          _
      $region28: #{tpu_custom_call.1} parent=5 // pred_fallthru
        _
      %p233 = scmp.le.s32.totalorder 1, %s19
      %p234 = scmp.lt.s32.totalorder %s19, 3
      %p235 = pnand %p233, %p234
      %p236 = pneg %p235
      // Predicated region
      $region33: #{tpu_custom_call.1} parent=5 // pred_check
        _
      $region34: #{tpu_custom_call.1} parent=5 // pred_check_branch
        %238 = sbr.rel (%p235) target = $region36
      $region35: #{tpu_custom_call.1} parent=5 // pred_region
        %s239 = ssub.s32 %s19, 1
        // Predicated region
        $region37: #{tpu_custom_call.1} parent=35 // pred_check
          %p240 = pneg %p57
        $region38: #{tpu_custom_call.1} parent=35 // pred_check_branch
          %242 = sbr.rel (%p240) target = $region40
        $region39: #{tpu_custom_call.1} parent=35 // pred_region
          %243 = dma.done [#allocation3], 256
        $region40: #{tpu_custom_call.1} parent=35 // pred_fallthru
          _
        %s244 = sand.u32 %s72, 1
        %s245 = scalar_lea.sflag [#allocation7], %s244
        %s246 = sand.u32 %s72, 1
        %s247 = smul.addr %s246, 32
        %s248 = scalar_lea.vmem [#allocation6], %s247
        // Predicated region
        $region41: #{tpu_custom_call.1} parent=35 // pred_check
          %p249 = pneg %p85
        $region42: #{tpu_custom_call.1} parent=35 // pred_check_branch
          %251 = sbr.rel (%p249) target = $region44
        $region43: #{tpu_custom_call.1} parent=35 // pred_region
          %252 = dma.done %s245, 512
        $region44: #{tpu_custom_call.1} parent=35 // pred_fallthru
          _
        // Predicated region
        $region45: #{tpu_custom_call.1} parent=35 // pred_check
          %p253 = pneg %p106
        $region46: #{tpu_custom_call.1} parent=35 // pred_check_branch
          %255 = sbr.rel (%p253) target = $region48
        $region47: #{tpu_custom_call.1} parent=35 // pred_region
          %256 = dma.done [#allocation5], 16
        $region48: #{tpu_custom_call.1} parent=35 // pred_fallthru
          _
        // Predicated region
        $region49: #{tpu_custom_call.1} parent=35 // pred_check
          %p257 = pneg %p127
        $region50: #{tpu_custom_call.1} parent=35 // pred_check_branch
          %259 = sbr.rel (%p257) target = $region52
        $region51: #{tpu_custom_call.1} parent=35 // pred_region
          %260 = dma.done [#allocation10], 16
        $region52: #{tpu_custom_call.1} parent=35 // pred_fallthru
          _
        %261 = sfence
        %p262 = pneg %p57
        %p263 = pneg %p54
        %s264 = sand.u32 %s72, 1
        %s265 = scalar_lea.sflag [#allocation7], %s264
        %s266 = sand.u32 %s72, 1
        %s267 = smul.addr %s266, 32
        %s268 = scalar_lea.vmem [#allocation6], %s267
        %p269 = pneg %p85
        %p270 = pneg %p82
        %p271 = pneg %p106
        %p272 = pneg %p103
        %p273 = pneg %p127
        %p274 = pneg %p124
        %p275 = pneg %p155
        %p276 = pneg %p152
        %s277 = sand.u32 %s142, 1
        %s278 = scalar_lea.sflag [#allocation4], %s277
        %s279 = sand.u32 %s142, 1
        %s280 = smul.addr %s279, 8
        %s281 = scalar_lea.vmem [#allocation11], %s280
        %v282 = vld [vmem:[#allocation2] sm:$0xff]
        %s283 = scalar_lea.vmem [#allocation2], 8
        %v284 = vld [vmem:[%s283] sm:$0xff]
        %s285 = smul.u32 %s29, 24
        %s286 = smul.u32 %s29, 6
        %s287 = sld [smem:[#allocation8 + %s285]]
        %s288 = sadd.s32 %s285, 1
        %s289 = sld [smem:[#allocation8 + %s288]]
        %s290 = sadd.s32 %s285, 2
        %s291 = sld [smem:[#allocation8 + %s290]]
        %s292 = sadd.s32 %s285, 3
        %s293 = sld [smem:[#allocation8 + %s292]]
        %s294 = sld [smem:[#allocation9 + %s286]]
        %v295 = vstv %s287
        %v296 = vsub.f32 %v282, %v295
        %v297 = vstv %s289
        %v298 = vsub.f32 %v284, %v297
        %v299 = vstv %s291
        %v300 = vsub.f32 %v299, %v282
        %v301 = vstv %s293
        %v302 = vsub.f32 %v301, %v284
        %v303 = vmin.f32 %v296, %v298
        %v304 = vmin.f32 %v300, %v302
        %v305 = vmin.f32 %v303, %v304
        %v306 = vmax.f32 %v296, %v298
        %v307 = vmax.f32 %v300, %v302
        %v308 = vmax.f32 %v306, %v307
        %vm309 = vcmp.gt.f32.partialorder %v305, 0.0
        %vm310 = vcmp.ge.f32.partialorder %v308, -1.0
        %vm311 = vmand %vm309, %vm310
        %vm312 = vcmp.le.f32.partialorder %v308, 64.0
        %vm313 = vmand %vm311, %vm312
        %v314 = vstv %s294
        %vm315 = vcmp.lt.f32.partialorder %v314, 1e+08
        %vm316 = vmand %vm313, %vm315
        %v317 = vsel %vm316, %v314, 1e+08
        %v318 = vsel %vm316, %v296, 0.0
        %v319 = vsel %vm316, %v298, 0.0
        %v320 = vsel %vm316, %v300, 0.0
        %v321 = vsel %vm316, %v302, 0.0
        %s322 = sadd.s32 %s285, 4
        %s323 = sld [smem:[#allocation8 + %s322]]
        %s324 = sadd.s32 %s285, 5
        %s325 = sld [smem:[#allocation8 + %s324]]
        %s326 = sadd.s32 %s285, 6
        %s327 = sld [smem:[#allocation8 + %s326]]
        %s328 = sadd.s32 %s285, 7
        %s329 = sld [smem:[#allocation8 + %s328]]
        %s330 = sadd.s32 %s286, 1
        %s331 = sld [smem:[#allocation9 + %s330]]
        %v332 = vstv %s323
        %v333 = vsub.f32 %v282, %v332
        %v334 = vstv %s325
        %v335 = vsub.f32 %v284, %v334
        %v336 = vstv %s327
        %v337 = vsub.f32 %v336, %v282
        %v338 = vstv %s329
        %v339 = vsub.f32 %v338, %v284
        %v340 = vmin.f32 %v333, %v335
        %v341 = vmin.f32 %v337, %v339
        %v342 = vmin.f32 %v340, %v341
        %v343 = vmax.f32 %v333, %v335
        %v344 = vmax.f32 %v337, %v339
        %v345 = vmax.f32 %v343, %v344
        %vm346 = vcmp.gt.f32.partialorder %v342, 0.0
        %vm347 = vcmp.ge.f32.partialorder %v345, -1.0
        %vm348 = vmand %vm346, %vm347
        %vm349 = vcmp.le.f32.partialorder %v345, 64.0
        %vm350 = vmand %vm348, %vm349
        %v351 = vstv %s331
        %vm352 = vcmp.lt.f32.partialorder %v351, %v317
        %vm353 = vmand %vm350, %vm352
        %v354 = vsel %vm353, %v351, %v317
        %v355 = vsel %vm353, %v333, %v318
        %v356 = vsel %vm353, %v335, %v319
        %v357 = vsel %vm353, %v337, %v320
        %v358 = vsel %vm353, %v339, %v321
        %s359 = sadd.s32 %s285, 8
        %s360 = sld [smem:[#allocation8 + %s359]]
        %s361 = sadd.s32 %s285, 9
        %s362 = sld [smem:[#allocation8 + %s361]]
        %s363 = sadd.s32 %s285, 10
        %s364 = sld [smem:[#allocation8 + %s363]]
        %s365 = sadd.s32 %s285, 11
        %s366 = sld [smem:[#allocation8 + %s365]]
        %s367 = sadd.s32 %s286, 2
        %s368 = sld [smem:[#allocation9 + %s367]]
        %v369 = vstv %s360
        %v370 = vsub.f32 %v282, %v369
        %v371 = vstv %s362
        %v372 = vsub.f32 %v284, %v371
        %v373 = vstv %s364
        %v374 = vsub.f32 %v373, %v282
        %v375 = vstv %s366
        %v376 = vsub.f32 %v375, %v284
        %v377 = vmin.f32 %v370, %v372
        %v378 = vmin.f32 %v374, %v376
        %v379 = vmin.f32 %v377, %v378
        %v380 = vmax.f32 %v370, %v372
        %v381 = vmax.f32 %v374, %v376
        %v382 = vmax.f32 %v380, %v381
        %vm383 = vcmp.gt.f32.partialorder %v379, 0.0
        %vm384 = vcmp.ge.f32.partialorder %v382, -1.0
        %vm385 = vmand %vm383, %vm384
        %vm386 = vcmp.le.f32.partialorder %v382, 64.0
        %vm387 = vmand %vm385, %vm386
        %v388 = vstv %s368
        %vm389 = vcmp.lt.f32.partialorder %v388, %v354
        %vm390 = vmand %vm387, %vm389
        %v391 = vsel %vm390, %v388, %v354
        %v392 = vsel %vm390, %v370, %v355
        %v393 = vsel %vm390, %v372, %v356
        %v394 = vsel %vm390, %v374, %v357
        %v395 = vsel %vm390, %v376, %v358
        %s396 = sadd.s32 %s285, 12
        %s397 = sld [smem:[#allocation8 + %s396]]
        %s398 = sadd.s32 %s285, 13
        %s399 = sld [smem:[#allocation8 + %s398]]
        %s400 = sadd.s32 %s285, 14
        %s401 = sld [smem:[#allocation8 + %s400]]
        %s402 = sadd.s32 %s285, 15
        %s403 = sld [smem:[#allocation8 + %s402]]
        %s404 = sadd.s32 %s286, 3
        %s405 = sld [smem:[#allocation9 + %s404]]
        %v406 = vstv %s397
        %v407 = vsub.f32 %v282, %v406
        %v408 = vstv %s399
        %v409 = vsub.f32 %v284, %v408
        %v410 = vstv %s401
        %v411 = vsub.f32 %v410, %v282
        %v412 = vstv %s403
        %v413 = vsub.f32 %v412, %v284
        %v414 = vmin.f32 %v407, %v409
        %v415 = vmin.f32 %v411, %v413
        %v416 = vmin.f32 %v414, %v415
        %v417 = vmax.f32 %v407, %v409
        %v418 = vmax.f32 %v411, %v413
        %v419 = vmax.f32 %v417, %v418
        %vm420 = vcmp.gt.f32.partialorder %v416, 0.0
        %vm421 = vcmp.ge.f32.partialorder %v419, -1.0
        %vm422 = vmand %vm420, %vm421
        %vm423 = vcmp.le.f32.partialorder %v419, 64.0
        %vm424 = vmand %vm422, %vm423
        %v425 = vstv %s405
        %vm426 = vcmp.lt.f32.partialorder %v425, %v391
        %vm427 = vmand %vm424, %vm426
        %v428 = vsel %vm427, %v425, %v391
        %v429 = vsel %vm427, %v407, %v392
        %v430 = vsel %vm427, %v409, %v393
        %v431 = vsel %vm427, %v411, %v394
        %v432 = vsel %vm427, %v413, %v395
        %s433 = sadd.s32 %s285, 16
        %s434 = sld [smem:[#allocation8 + %s433]]
        %s435 = sadd.s32 %s285, 17
        %s436 = sld [smem:[#allocation8 + %s435]]
        %s437 = sadd.s32 %s285, 18
        %s438 = sld [smem:[#allocation8 + %s437]]
        %s439 = sadd.s32 %s285, 19
        %s440 = sld [smem:[#allocation8 + %s439]]
        %s441 = sadd.s32 %s286, 4
        %s442 = sld [smem:[#allocation9 + %s441]]
        %v443 = vstv %s434
        %v444 = vsub.f32 %v282, %v443
        %v445 = vstv %s436
        %v446 = vsub.f32 %v284, %v445
        %v447 = vstv %s438
        %v448 = vsub.f32 %v447, %v282
        %v449 = vstv %s440
        %v450 = vsub.f32 %v449, %v284
        %v451 = vmin.f32 %v444, %v446
        %v452 = vmin.f32 %v448, %v450
        %v453 = vmin.f32 %v451, %v452
        %v454 = vmax.f32 %v444, %v446
        %v455 = vmax.f32 %v448, %v450
        %v456 = vmax.f32 %v454, %v455
        %vm457 = vcmp.gt.f32.partialorder %v453, 0.0
        %vm458 = vcmp.ge.f32.partialorder %v456, -1.0
        %vm459 = vmand %vm457, %vm458
        %vm460 = vcmp.le.f32.partialorder %v456, 64.0
        %vm461 = vmand %vm459, %vm460
        %v462 = vstv %s442
        %vm463 = vcmp.lt.f32.partialorder %v462, %v428
        %vm464 = vmand %vm461, %vm463
        %v465 = vsel %vm464, %v462, %v428
        %v466 = vsel %vm464, %v444, %v429
        %v467 = vsel %vm464, %v446, %v430
        %v468 = vsel %vm464, %v448, %v431
        %v469 = vsel %vm464, %v450, %v432
        %s470 = sadd.s32 %s285, 20
        %s471 = sld [smem:[#allocation8 + %s470]]
        %s472 = sadd.s32 %s285, 21
        %s473 = sld [smem:[#allocation8 + %s472]]
        %s474 = sadd.s32 %s285, 22
        %s475 = sld [smem:[#allocation8 + %s474]]
        %s476 = sadd.s32 %s285, 23
        %s477 = sld [smem:[#allocation8 + %s476]]
        %s478 = sadd.s32 %s286, 5
        %s479 = sld [smem:[#allocation9 + %s478]]
        %v480 = vstv %s471
        %v481 = vsub.f32 %v282, %v480
        %v482 = vstv %s473
        %v483 = vsub.f32 %v284, %v482
        %v484 = vstv %s475
        %v485 = vsub.f32 %v484, %v282
        %v486 = vstv %s477
        %v487 = vsub.f32 %v486, %v284
        %v488 = vmin.f32 %v481, %v483
        %v489 = vmin.f32 %v485, %v487
        %v490 = vmin.f32 %v488, %v489
        %v491 = vmax.f32 %v481, %v483
        %v492 = vmax.f32 %v485, %v487
        %v493 = vmax.f32 %v491, %v492
        %vm494 = vcmp.gt.f32.partialorder %v490, 0.0
        %vm495 = vcmp.ge.f32.partialorder %v493, -1.0
        %vm496 = vmand %vm494, %vm495
        %vm497 = vcmp.le.f32.partialorder %v493, 64.0
        %vm498 = vmand %vm496, %vm497
        %v499 = vstv %s479
        %vm500 = vcmp.lt.f32.partialorder %v499, %v465
        %vm501 = vmand %vm498, %vm500
        %v502 = vsel %vm501, %v499, %v465
        %v503 = vsel %vm501, %v481, %v466
        %v504 = vsel %vm501, %v483, %v467
        %v505 = vsel %vm501, %v485, %v468
        %v506 = vsel %vm501, %v487, %v469
        %vm507 = vcmp.lt.f32.partialorder %v502, 1e+08
        %v508 = vlaneseq
        %v509 = vshrl.u32 %v508, 7
        %v510 = vlaneseq
        %v511 = vand.u32 %v510, 127
        %s512 = smul.u32 %s28, 8
        %v513 = vstv %s512
        %v514 = vadd.s32 %v513, %v509
        %v515 = vmul.u32 %v514, 128
        %v516 = vadd.s32 %v515, %v511
        %vm517 = vcmp.lt.s32.totalorder %v516, 256
        %vm518 = vmand %vm507, %vm517
        %v519 = vld [vmem:[%s248] sm:$0xff]
        %v520 = vld [vmem:[%s248 + $0x8] sm:$0xff]
        %v521 = vld [vmem:[%s248 + $0x10] sm:$0xff]
        %v522 = vld [vmem:[%s248 + $0x18] sm:$0xff]
        %v523 = vadd.f32 %v503, %v505
        %v524 = vadd.f32 %v504, %v506
        %v525 = vmul.f32 %v523, %v524
        %v526 = vadd.f32 %v519, %v521
        %v527 = vadd.f32 %v520, %v522
        %v528 = vmul.f32 %v526, %v527
        %v529 = vmin.f32 %v519, %v503
        %v530 = vmin.f32 %v521, %v505
        %v531 = vadd.f32 %v529, %v530
        %v532 = vmin.f32 %v522, %v506
        %v533 = vmin.f32 %v520, %v504
        %v534 = vadd.f32 %v532, %v533
        %v535 = vmul.f32 %v531, %v534
        %v536 = vadd.f32 %v525, %v528
        %v537 = vsub.f32 %v536, %v535
        %v538 = vadd.f32 %v535, 1.0
        %v539 = vadd.f32 %v537, 1.0
        %v540 = vrcp.pop %v539
        %v541 = vmul.f32 %v538, %v540
        %v542 = vmax.f32 %v519, %v503
        %v543 = vmax.f32 %v521, %v505
        %v544 = vadd.f32 %v542, %v543
        %v545 = vmax.f32 %v522, %v506
        %v546 = vmax.f32 %v520, %v504
        %v547 = vadd.f32 %v545, %v546
        %v548 = vmul.f32 %v544, %v547
        %v549 = vadd.f32 %v548, 1e-07
        %v550 = vsub.f32 %v549, %v537
        %v551 = vrcp.pop %v549
        %v552 = vmul.f32 %v550, %v551
        %v553 = vsub.f32 %v541, %v552
        %v554 = vsub.f32 1.0, %v553
        %v555 = vmin.f32 %v503, %v505
        %v556 = vmax.f32 %v503, %v505
        %v557 = vmin.f32 %v504, %v506
        %v558 = vmax.f32 %v504, %v506
        %v559 = vmul.f32 %v555, %v557
        %v560 = vrsqrt.pop %v559
        %v561 = vmul.f32 %v559, %v560
        %vm562 = vcmp.eq.f32.partialorder %v559, inf
        %v563 = vsel %vm562, %v559, %v561
        %vm564 = vcmp.eq.f32.partialorder %v559, 0.0
        %v565 = vand.u32 %v559, 2147483648
        %v566 = vsel %vm564, %v565, %v563
        %v567 = vmul.f32 %v556, %v558
        %v568 = vmax.f32 %v567, 1e-12
        %v569 = vrsqrt.pop %v568
        %v570 = vmul.f32 %v566, %v569
        %v571 = vsel %vm518, %v570, 0.0
        %v572 = vsel %vm518, %v554, 0.0
        %v573 = vmul.f32 %v572, %v571
        %v574 = vrot.slane %v573, 4
        %v575 = vadd.f32 %v573, %v574
        %v576 = vrot.slane %v575, 2
        %v577 = vadd.f32 %v575, %v576
        %v578 = vrot.slane %v577, 1
        %v579 = vadd.f32 %v577, %v578
        %v580 = vrot.slane %v571, 4
        %v581 = vadd.f32 %v571, %v580
        %v582 = vrot.slane %v581, 2
        %v583 = vadd.f32 %v581, %v582
        %v584 = vrot.slane %v583, 1
        %v585 = vadd.f32 %v583, %v584
        %v586 = vrot.slane %v572, 4
        %v587 = vadd.f32 %v572, %v586
        %v588 = vrot.slane %v587, 2
        %v589 = vadd.f32 %v587, %v588
        %v590 = vrot.slane %v589, 1
        %v591 = vadd.f32 %v589, %v590
        %v592 = vsel %vm518, 1, 0
        %v593 = vcvt.s32.f32 %v592
        %v594 = vrot.slane %v593, 4
        %v595 = vadd.f32 %v593, %v594
        %v596 = vrot.slane %v595, 2
        %v597 = vadd.f32 %v595, %v596
        %v598 = vrot.slane %v597, 1
        %v599 = vadd.f32 %v597, %v598
        %vm600 = vcmask 1040384
        %v601 = vsel %vm600, %v579, %v585
        %vm602 = vcmask 1041408
        %v603 = vsel %vm602, %v601, %v591
        %vm604 = vcmask 1042432
        %v605 = vsel %vm604, %v603, %v599
        %vm606 = vcmask 1043456
        %v607 = vsel %vm606, %v605, 0.0
        %608 = vst [vmem:[%s281] sm:$0xff] %v607
        %s609 = sand.u32 %s142, 1
        %s610 = scalar_lea.sflag [#allocation4], %s609
        %s611 = sand.u32 %s142, 1
        %s612 = smul.addr %s611, 8
        %s613 = scalar_lea.vmem [#allocation11], %s612
        // Predicated region
        $region53: #{tpu_custom_call.1} parent=35 // pred_check
          %p614 = pneg %p152
        $region54: #{tpu_custom_call.1} parent=35 // pred_check_branch
          %616 = sbr.rel (%p614) target = $region56
        $region55: #{tpu_custom_call.1} parent=35 // pred_region
          %s618 = ssub.s32 128, 128
          %619 = vsyncadd %s610, %s618
          %s620 = smul.addr %s28, 2
          %s621 = sadd.s32 %s29, %s620
          %s622 = smul.addr %s621, 128
          %s623 = scalar_lea.hbm %s4, %s622
          %s625 = sshll.u32 %s613, 4
          %s626 = int_to_ptr.vmem [resolvable:$true] %s625
          %628 = dma.vmem_to_hbm [thread:$0]  %s626, 128, %s623, %s610
        $region56: #{tpu_custom_call.1} parent=35 // pred_fallthru
          _
      $region36: #{tpu_custom_call.1} parent=5 // pred_fallthru
        _
      %p629 = scmp.le.s32.totalorder 2, %s19
      // Predicated region
      $region57: #{tpu_custom_call.1} parent=5 // pred_check
        %p630 = pneg %p629
      $region58: #{tpu_custom_call.1} parent=5 // pred_check_branch
        %632 = sbr.rel (%p630) target = $region60
      $region59: #{tpu_custom_call.1} parent=5 // pred_region
        %s633 = ssub.s32 %s19, 2
        // Predicated region
        $region61: #{tpu_custom_call.1} parent=59 // pred_check
          %p634 = pneg %p158
        $region62: #{tpu_custom_call.1} parent=59 // pred_check_branch
          %636 = sbr.rel (%p634) target = $region64
        $region63: #{tpu_custom_call.1} parent=59 // pred_region
          %s637 = sand.u32 %s143, 1
          %s638 = scalar_lea.sflag [#allocation4], %s637
          %s639 = sand.u32 %s143, 1
          %s640 = smul.addr %s639, 8
          %s641 = scalar_lea.vmem [#allocation11], %s640
          %642 = dma.done %s638, 128
        $region64: #{tpu_custom_call.1} parent=59 // pred_fallthru
          _
      $region60: #{tpu_custom_call.1} parent=5 // pred_fallthru
        _
    $region6: #{tpu_custom_call.1} parent=1 // loop_footer
      %s23 = sadd.s32 1, %s19
    $region7: #{tpu_custom_call.1} parent=1 // loop_footer_branch
      %18 = sbr.rel target = $region3
    $region8: #{tpu_custom_call.1} parent=1 // loop_exit
      _
    %643 = vsyncpa [#allocation3], 1
    %s644 = scalar_lea.sflag [#allocation3], 1
    %645 = vsyncpa %s644, 1
    %646 = vsyncpa [#allocation7], 1
    %s647 = scalar_lea.sflag [#allocation7], 1
    %648 = vsyncpa %s647, 1
    %649 = vsyncpa [#allocation4], 1
    %s650 = scalar_lea.sflag [#allocation4], 1
    %651 = vsyncpa %s650, 1
    %652 = vsyncpa [#allocation5], 1
    %s653 = scalar_lea.sflag [#allocation5], 1
    %654 = vsyncpa %s653, 1
    %655 = vsyncpa [#allocation10], 1

</llo_original>
